<compile_context>
chip_gen: v5e
topology: v5e:2x2
jax: 0.10.0
libtpu: 0.0.40
codegen_flags: <defaults>
</compile_context>

<pallas_src>
import functools
import math

import jax
import jax.numpy as jnp
from jax.experimental import pallas as pl
from jax.experimental.pallas import tpu as pltpu


# ---------------------------------------------------------------------------
# Kernels
# ---------------------------------------------------------------------------

def _embed_single_kernel(x_ref, w_ref, b_ref, o_ref):
    """Whole problem resident in VMEM: one fused MXU matmul, one dense store."""
    o_ref[...] = (
        jnp.dot(x_ref[...], w_ref[...], preferred_element_type=jnp.float32)
        + b_ref[...]
    ).astype(o_ref.dtype)


def _embed_tiled_kernel(x_ref, w_ref, b_ref, o_ref, acc_ref, *, x_resident):
    """grid = (nj, nk): j = output-column tiles (independent), k = reduction."""
    k = pl.program_id(1)

    @pl.when(k == 0)
    def _():
        acc_ref[...] = jnp.zeros_like(acc_ref)

    if x_resident:
        # x_ref holds ALL fused activations reshaped to (nk, 3B, tk); its block
        # index is constant, so it is DMA'd exactly once for the whole kernel
        # instead of being re-streamed for every output-column tile.
        x = x_ref[k]                       # (3B, tk)
    else:
        x = x_ref[...]                     # (3B, tk) K tile streamed per step

    # One fused matmul for all three branches against the shared weight tile.
    acc_ref[...] += jnp.dot(x, w_ref[...], preferred_element_type=jnp.float32)

    @pl.when(k == pl.num_programs(1) - 1)
    def _():
        # (1, tn) bias broadcasts over (3B, tn); single lane-dense store.
        o_ref[...] = (acc_ref[...] + b_ref[...]).astype(o_ref.dtype)


# ---------------------------------------------------------------------------
# Wrapper
# ---------------------------------------------------------------------------

def _round_up(x, m):
    return ((x + m - 1) // m) * m


def _choose_tile(dim, max_tile, align=128):
    """Largest multiple of `align` dividing `dim` (dim % align == 0), capped at
    `max_tile`; returns `dim` itself when it already fits."""
    if dim <= max_tile:
        return dim
    best = align
    t = align
    while t <= max_tile:
        if dim % t == 0:
            best = t
        t += align
    return best


def naver_net_forward(x1, x2, x3, w, b, *,
                      compute_dtype=jnp.bfloat16,
                      single_shot_budget_bytes=8 * 1024 * 1024):
    """Shared linear embedding backbone applied to x1, x2, x3.

    x1, x2, x3: [B, C, H, W] float32
    w:          [C*H*W, E]   float32 (shared backbone weights)
    b:          [E]          float32 (shared backbone bias)
    returns (o1, o2, o3), each [B, E] float32
    """
    B = x1.shape[0]
    D = math.prod(x1.shape[1:])
    E = w.shape[1]
    M = 3 * B                                # fused row dimension

    D_pad = _round_up(D, 128)                # lane-aligned reduction dim
    E_pad = _round_up(E, 128)                # lane-dense output / MXU columns

    # Fuse the three branches into one (3B, D) LHS: the shared weight tile
    # then feeds a single MXU matmul per grid step instead of three tiny dots.
    x = jnp.concatenate(
        [x1.reshape(B, D), x2.reshape(B, D), x3.reshape(B, D)], axis=0)

    if D_pad != D:
        x = jnp.pad(x, ((0, 0), (0, D_pad - D)))
    if D_pad != D or E_pad != E:
        w_p = jnp.pad(w, ((0, D_pad - D), (0, E_pad - E)))
    else:
        w_p = w
    b_p = b if E_pad == E else jnp.pad(b, (0, E_pad - E))
    b2 = b_p.reshape(1, E_pad).astype(jnp.float32)

    # bf16 streaming (f32 accumulation in the dot): halves HBM bytes of the
    # bandwidth-dominant W stream and feeds the native bf16 MXU path.
    x = x.astype(compute_dtype)
    w_p = w_p.astype(compute_dtype)
    itemsize = jnp.dtype(compute_dtype).itemsize

    compiler_params_1d = pltpu.CompilerParams(
        dimension_semantics=("arbitrary",),
        vmem_limit_bytes=32 * 1024 * 1024,
    )
    compiler_params_2d = pltpu.CompilerParams(
        dimension_semantics=("parallel", "arbitrary"),
        vmem_limit_bytes=32 * 1024 * 1024,
    )

    # Estimated resident VMEM for the single-shot path (x2 for double buffers).
    single_bytes = 2 * (M * D_pad * itemsize
                        + D_pad * E_pad * itemsize
                        + E_pad * 4
                        + M * E_pad * 4)

    if single_bytes <= single_shot_budget_bytes:
        # ---------------- single-shot fast path (no K/N tiling) ------------
        out = pl.pallas_call(
            _embed_single_kernel,
            out_shape=jax.ShapeDtypeStruct((M, E_pad), jnp.float32),
            grid_spec=pltpu.PrefetchScalarGridSpec(
                num_scalar_prefetch=0,
                grid=(1,),
                in_specs=[
                    pl.BlockSpec((M, D_pad), lambda i: (0, 0)),      # fused x
                    pl.BlockSpec((D_pad, E_pad), lambda i: (0, 0)),  # shared W
                    pl.BlockSpec((1, E_pad), lambda i: (0, 0)),      # shared b
                ],
                out_specs=pl.BlockSpec((M, E_pad), lambda i: (0, 0)),
            ),
            compiler_params=compiler_params_1d,
        )(x, w_p, b2)
    else:
        # ---------------- K-tiled path (large D / E) ------------------------
        tk = _choose_tile(D_pad, max_tile=1024)
        tn = _choose_tile(E_pad, max_tile=512)
        nk = D_pad // tk
        nj = E_pad // tn

        # Keep the fused activations resident in VMEM when small: constant
        # block index -> DMA'd once; otherwise stream (3B, tk) K tiles.
        x_resident = (M * D_pad * itemsize) <= 4 * 1024 * 1024
        if x_resident:
            # (3B, D_pad) -> (nk, 3B, tk) so the kernel indexes the K tile on
            # the leading (untiled) axis -- cheap, layout-friendly.
            x_in = x.reshape(M, nk, tk).transpose(1, 0, 2)
            x_spec = pl.BlockSpec((nk, M, tk), lambda j, k: (0, 0, 0))
        else:
            x_in = x
            x_spec = pl.BlockSpec((M, tk), lambda j, k: (0, k))

        kernel = functools.partial(_embed_tiled_kernel, x_resident=x_resident)

        out = pl.pallas_call(
            kernel,
            out_shape=jax.ShapeDtypeStruct((M, E_pad), jnp.float32),
            grid_spec=pltpu.PrefetchScalarGridSpec(
                num_scalar_prefetch=0,
                grid=(nj, nk),                       # reduction axis last
                in_specs=[
                    x_spec,                                          # fused x
                    pl.BlockSpec((tk, tn), lambda j, k: (k, j)),     # shared W
                    pl.BlockSpec((1, tn), lambda j, k: (0, j)),      # shared b
                ],
                out_specs=pl.BlockSpec((M, tn), lambda j, k: (0, j)),
                scratch_shapes=[pltpu.VMEM((M, tn), jnp.float32)],
            ),
            compiler_params=compiler_params_2d,
        )(x_in, w_p, b2)

    o1 = out[:B, :E]
    o2 = out[B:2 * B, :E]
    o3 = out[2 * B:3 * B, :E]
    return o1, o2, o3


# ---------------------------------------------------------------------------
# References & test
# ---------------------------------------------------------------------------

def _reference_f32(x1, x2, x3, w, b):
    def emb(x):
        return x.reshape(x.shape[0], -1) @ w + b
    return emb(x1), emb(x2), emb(x3)


def _reference_matched(x1, x2, x3, w, b, dt):
    # Same operand precision as the kernel (bf16 operands, f32 accumulation).
    wd = w.astype(dt)

    def emb(x):
        xd = x.reshape(x.shape[0], -1).astype(dt)
        return jnp.dot(xd, wd, preferred_element_type=jnp.float32) + b
    return emb(x1), emb(x2), emb(x3)


def _check(outs, refs_tight, refs_f32, B, E):
    for o, q, r in zip(outs, refs_tight, refs_f32):
        assert o.shape == (B, E)
        # Tight: validates the kernel math at matched precision.
        assert jnp.allclose(o, q, atol=5e-3, rtol=5e-3)
        # Loose: validates module semantics vs. pure-f32 reference
        # (slack covers bf16 rounding of the streamed operands).
        assert jnp.allclose(o, r, atol=5e-2, rtol=5e-2)


if __name__ == "__main__":
    key = jax.random.PRNGKey(0)
    (k1, k2, k3, kw, kb,
     k4, k5, k6, kw2, kb2) = jax.random.split(key, 10)

    fwd = jax.jit(naver_net_forward)

    # ---- Test 1: module-scale shapes (exercises the single-shot path) -----
    B, C, H, Wd = 2, 4, 16, 16
    E = 32
    D = C * H * Wd

    x1 = jax.random.normal(k1, (B, C, H, Wd), dtype=jnp.float32)
    x2 = jax.random.normal(k2, (B, C, H, Wd), dtype=jnp.float32)
    x3 = jax.random.normal(k3, (B, C, H, Wd), dtype=jnp.float32)
    w = jax.random.normal(kw, (D, E), dtype=jnp.float32) * (1.0 / D ** 0.5)
    b = jax.random.normal(kb, (E,), dtype=jnp.float32) * 0.01

    o1, o2, o3 = fwd(x1, x2, x3, w, b)
    jax.block_until_ready((o1, o2, o3))

    _check((o1, o2, o3),
           _reference_matched(x1, x2, x3, w, b, jnp.bfloat16),
           _reference_f32(x1, x2, x3, w, b), B, E)

    # ---- Test 2: larger shapes (exercises the K-tiled / resident-x path) --
    B2, C2, H2, W2, E2 = 2, 8, 32, 32, 512
    D2 = C2 * H2 * W2

    y1 = jax.random.normal(k4, (B2, C2, H2, W2), dtype=jnp.float32)
    y2 = jax.random.normal(k5, (B2, C2, H2, W2), dtype=jnp.float32)
    y3 = jax.random.normal(k6, (B2, C2, H2, W2), dtype=jnp.float32)
    w2 = jax.random.normal(kw2, (D2, E2), dtype=jnp.float32) * (1.0 / D2 ** 0.5)
    b2 = jax.random.normal(kb2, (E2,), dtype=jnp.float32) * 0.01

    p1, p2, p3 = fwd(y1, y2, y3, w2, b2)
    jax.block_until_ready((p1, p2, p3))

    _check((p1, p2, p3),
           _reference_matched(y1, y2, y3, w2, b2, jnp.bfloat16),
           _reference_f32(y1, y2, y3, w2, b2), B2, E2)

    print("KERNEL_OK")
</pallas_src>

<mosaic_0001>
module attributes {stable_mosaic.version = 11 : i64} {
  func.func @_embed_single_kernel(%arg0: i32, %arg1: memref<6x1024xbf16, #tpu.memory_space<vmem>>, %arg2: memref<1024x128xbf16, #tpu.memory_space<vmem>>, %arg3: memref<1x128xf32, #tpu.memory_space<vmem>>, %arg4: memref<6x128xf32, #tpu.memory_space<vmem>>) attributes {dimension_semantics = [#tpu.dimension_semantics<arbitrary>], iteration_bounds = array<i64: 1>, scalar_prefetch = 0 : i64, scratch_operands = 0 : i64, tpu.core_type = #tpu.core_type<tc>, window_params = [{pipeline_mode = #tpu.pipeline_mode<synchronous>, transform_indices = @transform_0, window_bounds = array<i64: 6, 1024>}, {pipeline_mode = #tpu.pipeline_mode<synchronous>, transform_indices = @transform_1, window_bounds = array<i64: 1024, 128>}, {pipeline_mode = #tpu.pipeline_mode<synchronous>, transform_indices = @transform_2, window_bounds = array<i64: 1, 128>}, {pipeline_mode = #tpu.pipeline_mode<synchronous>, transform_indices = @transform_3, window_bounds = array<i64: 6, 128>}]} {
    %c0 = arith.constant 0 : index
    %c0_0 = arith.constant 0 : index
    %0 = vector.load %arg1[%c0, %c0_0] : memref<6x1024xbf16, #tpu.memory_space<vmem>>, vector<6x1024xbf16>
    %c0_1 = arith.constant 0 : index
    %c0_2 = arith.constant 0 : index
    %1 = vector.load %arg2[%c0_1, %c0_2] : memref<1024x128xbf16, #tpu.memory_space<vmem>>, vector<1024x128xbf16>
    %cst = arith.constant dense<0.000000e+00> : vector<6x128xf32>
    %2 = tpu.matmul %0, %1, %cst {dimension_numbers = #tpu.dot_dimension_numbers<[1], [0], [0], [1], [0, 0, 1, 1], [], []>} : vector<6x1024xbf16>, vector<1024x128xbf16>, vector<6x128xf32> -> vector<6x128xf32>
    %c0_3 = arith.constant 0 : index
    %c0_4 = arith.constant 0 : index
    %3 = vector.load %arg3[%c0_3, %c0_4] : memref<1x128xf32, #tpu.memory_space<vmem>>, vector<1x128xf32>
    %4 = vector.broadcast %3 : vector<1x128xf32> to vector<6x128xf32>
    %5 = arith.addf %2, %4 : vector<6x128xf32>
    %c0_5 = arith.constant 0 : index
    %c0_6 = arith.constant 0 : index
    %6 = vector.load %arg4[%c0_5, %c0_6] : memref<6x128xf32, #tpu.memory_space<vmem>>, vector<6x128xf32>
    tpu.vector_store %arg4[%c0_5, %c0_6], %5 {strides = array<i32>} : memref<6x128xf32, #tpu.memory_space<vmem>>, vector<6x128xf32>,
    return
  }
  func.func @transform_0(%arg0: i32) -> (i32, i32) {
    %c0_i32 = arith.constant 0 : i32
    %c0_i32_0 = arith.constant 0 : i32
    %c0_i32_1 = arith.constant 0 : i32
    return %c0_i32, %c0_i32_0 : i32, i32
  }
  func.func @transform_1(%arg0: i32) -> (i32, i32) {
    %c0_i32 = arith.constant 0 : i32
    %c0_i32_0 = arith.constant 0 : i32
    %c0_i32_1 = arith.constant 0 : i32
    return %c0_i32, %c0_i32_0 : i32, i32
  }
  func.func @transform_2(%arg0: i32) -> (i32, i32) {
    %c0_i32 = arith.constant 0 : i32
    %c0_i32_0 = arith.constant 0 : i32
    %c0_i32_1 = arith.constant 0 : i32
    return %c0_i32, %c0_i32_0 : i32, i32
  }
  func.func @transform_3(%arg0: i32) -> (i32, i32) {
    %c0_i32 = arith.constant 0 : i32
    %c0_i32_0 = arith.constant 0 : i32
    %c0_i32_1 = arith.constant 0 : i32
    return %c0_i32, %c0_i32_0 : i32, i32
  }
}

</mosaic_0001>

<llo_original>
// kernel: naver_net_forward.1
$region0: #{naver_net_forward.1}
  #allocation0 [shape = 'u32[]', space=smem, size = 0x4, offset = 0x4, fixed_abs, tag = 'smem constant byte address 0x4 - core index']
  #allocation1 [shape = 'u32[72,128]{1,0:T(1,128)}', space=vmem, size = 0x9000, scoped, tag = 'internal scratch']
  %s0 = inlined_call_operand.vmem [shape: bf16[6,1024], index: 0, kind: input, shape index: {}]
  %s1 = inlined_call_operand.vmem [shape: bf16[1024,128], index: 1, kind: input, shape index: {}]
  %s2 = inlined_call_operand.vmem [shape: f32[1,128], index: 2, kind: input, shape index: {}]
  %s3 = inlined_call_operand.vmem [shape: f32[6,128], index: 3, kind: output, shape index: {}]
  %s4 = sld [smem:[#allocation0]]
  $region22: #{naver_net_forward.1} parent=0
    _
  %s6 = ssub.s32 1, %s4
  %s7 = scalar_select 0, %s6, %s4
  // Predicated region
  $region2: #{naver_net_forward.1} parent=0 // pred_check
    _
  $region3: #{naver_net_forward.1} parent=0 // pred_check_branch
    %9 = sbr.rel (0) target = $region5
  $region4: #{naver_net_forward.1} parent=0 // pred_region
    _
  $region5: #{naver_net_forward.1} parent=0 // pred_fallthru
    _
  // Predicated region
  $region6: #{naver_net_forward.1} parent=0 // pred_check
    _
  $region7: #{naver_net_forward.1} parent=0 // pred_check_branch
    %11 = sbr.rel (0) target = $region9
  $region8: #{naver_net_forward.1} parent=0 // pred_region
    _
  $region9: #{naver_net_forward.1} parent=0 // pred_fallthru
    _
  // Predicated region
  $region10: #{naver_net_forward.1} parent=0 // pred_check
    _
  $region11: #{naver_net_forward.1} parent=0 // pred_check_branch
    %13 = sbr.rel (0) target = $region13
  $region12: #{naver_net_forward.1} parent=0 // pred_region
    _
  $region13: #{naver_net_forward.1} parent=0 // pred_fallthru
    _
  %v14 = vld [vmem:[%s0] sm:$0x77]
  %v15 = vld [vmem:[%s0 + $0x8] sm:$0x77]
  %v16 = vld [vmem:[%s0 + $0x10] sm:$0x77]
  %v17 = vld [vmem:[%s0 + $0x18] sm:$0x77]
  %v18 = vld [vmem:[%s1] sm:$0xf]
  %v19 = vld [vmem:[%s1 + $0x4] sm:$0xf]
  %v20 = vld [vmem:[%s1 + $0x8] sm:$0xf]
  %v21 = vld [vmem:[%s1 + $0xc] sm:$0xf]
  %v22 = vld [vmem:[%s1 + $0x10] sm:$0xf]
  %v23 = vld [vmem:[%s1 + $0x14] sm:$0xf]
  %v24 = vld [vmem:[%s1 + $0x18] sm:$0xf]
  %v25 = vld [vmem:[%s1 + $0x1c] sm:$0xf]
  %v26 = vld [vmem:[%s1 + $0x20] sm:$0xf]
  %v27 = vld [vmem:[%s1 + $0x24] sm:$0xf]
  %v28 = vld [vmem:[%s1 + $0x28] sm:$0xf]
  %v29 = vld [vmem:[%s1 + $0x2c] sm:$0xf]
  %v30 = vld [vmem:[%s1 + $0x30] sm:$0xf]
  %v31 = vld [vmem:[%s1 + $0x34] sm:$0xf]
  %v32 = vld [vmem:[%s1 + $0x38] sm:$0xf]
  %v33 = vld [vmem:[%s1 + $0x3c] sm:$0xf]
  %v34 = vld [vmem:[%s1 + $0x40] sm:$0xf]
  %v35 = vld [vmem:[%s1 + $0x44] sm:$0xf]
  %v36 = vld [vmem:[%s1 + $0x48] sm:$0xf]
  %v37 = vld [vmem:[%s1 + $0x4c] sm:$0xf]
  %v38 = vld [vmem:[%s1 + $0x50] sm:$0xf]
  %v39 = vld [vmem:[%s1 + $0x54] sm:$0xf]
  %v40 = vld [vmem:[%s1 + $0x58] sm:$0xf]
  %v41 = vld [vmem:[%s1 + $0x5c] sm:$0xf]
  %v42 = vld [vmem:[%s1 + $0x60] sm:$0xf]
  %v43 = vld [vmem:[%s1 + $0x64] sm:$0xf]
  %v44 = vld [vmem:[%s1 + $0x68] sm:$0xf]
  %v45 = vld [vmem:[%s1 + $0x6c] sm:$0xf]
  %v46 = vld [vmem:[%s1 + $0x70] sm:$0xf]
  %v47 = vld [vmem:[%s1 + $0x74] sm:$0xf]
  %v48 = vld [vmem:[%s1 + $0x78] sm:$0xf]
  %v49 = vld [vmem:[%s1 + $0x7c] sm:$0xf]
  %v50 = vld [vmem:[%s1 + $0x80] sm:$0xf]
  %v51 = vld [vmem:[%s1 + $0x84] sm:$0xf]
  %v52 = vld [vmem:[%s1 + $0x88] sm:$0xf]
  %v53 = vld [vmem:[%s1 + $0x8c] sm:$0xf]
  %v54 = vld [vmem:[%s1 + $0x90] sm:$0xf]
  %v55 = vld [vmem:[%s1 + $0x94] sm:$0xf]
  %v56 = vld [vmem:[%s1 + $0x98] sm:$0xf]
  %v57 = vld [vmem:[%s1 + $0x9c] sm:$0xf]
  %v58 = vld [vmem:[%s1 + $0xa0] sm:$0xf]
  %v59 = vld [vmem:[%s1 + $0xa4] sm:$0xf]
  %v60 = vld [vmem:[%s1 + $0xa8] sm:$0xf]
  %v61 = vld [vmem:[%s1 + $0xac] sm:$0xf]
  %v62 = vld [vmem:[%s1 + $0xb0] sm:$0xf]
  %v63 = vld [vmem:[%s1 + $0xb4] sm:$0xf]
  %v64 = vld [vmem:[%s1 + $0xb8] sm:$0xf]
  %v65 = vld [vmem:[%s1 + $0xbc] sm:$0xf]
  %v66 = vld [vmem:[%s1 + $0xc0] sm:$0xf]
  %v67 = vld [vmem:[%s1 + $0xc4] sm:$0xf]
  %v68 = vld [vmem:[%s1 + $0xc8] sm:$0xf]
  %v69 = vld [vmem:[%s1 + $0xcc] sm:$0xf]
  %v70 = vld [vmem:[%s1 + $0xd0] sm:$0xf]
  %v71 = vld [vmem:[%s1 + $0xd4] sm:$0xf]
  %v72 = vld [vmem:[%s1 + $0xd8] sm:$0xf]
  %v73 = vld [vmem:[%s1 + $0xdc] sm:$0xf]
  %v74 = vld [vmem:[%s1 + $0xe0] sm:$0xf]
  %v75 = vld [vmem:[%s1 + $0xe4] sm:$0xf]
  %v76 = vld [vmem:[%s1 + $0xe8] sm:$0xf]
  %v77 = vld [vmem:[%s1 + $0xec] sm:$0xf]
  %v78 = vld [vmem:[%s1 + $0xf0] sm:$0xf]
  %v79 = vld [vmem:[%s1 + $0xf4] sm:$0xf]
  %v80 = vld [vmem:[%s1 + $0xf8] sm:$0xf]
  %v81 = vld [vmem:[%s1 + $0xfc] sm:$0xf]
  %v82 = vld [vmem:[%s1 + $0x100] sm:$0xf]
  %v83 = vld [vmem:[%s1 + $0x104] sm:$0xf]
  %v84 = vld [vmem:[%s1 + $0x108] sm:$0xf]
  %v85 = vld [vmem:[%s1 + $0x10c] sm:$0xf]
  %v86 = vld [vmem:[%s1 + $0x110] sm:$0xf]
  %v87 = vld [vmem:[%s1 + $0x114] sm:$0xf]
  %v88 = vld [vmem:[%s1 + $0x118] sm:$0xf]
  %v89 = vld [vmem:[%s1 + $0x11c] sm:$0xf]
  %v90 = vld [vmem:[%s1 + $0x120] sm:$0xf]
  %v91 = vld [vmem:[%s1 + $0x124] sm:$0xf]
  %v92 = vld [vmem:[%s1 + $0x128] sm:$0xf]
  %v93 = vld [vmem:[%s1 + $0x12c] sm:$0xf]
  %v94 = vld [vmem:[%s1 + $0x130] sm:$0xf]
  %v95 = vld [vmem:[%s1 + $0x134] sm:$0xf]
  %v96 = vld [vmem:[%s1 + $0x138] sm:$0xf]
  %v97 = vld [vmem:[%s1 + $0x13c] sm:$0xf]
  %v98 = vld [vmem:[%s1 + $0x140] sm:$0xf]
  %v99 = vld [vmem:[%s1 + $0x144] sm:$0xf]
  %v100 = vld [vmem:[%s1 + $0x148] sm:$0xf]
  %v101 = vld [vmem:[%s1 + $0x14c] sm:$0xf]
  %v102 = vld [vmem:[%s1 + $0x150] sm:$0xf]
  %v103 = vld [vmem:[%s1 + $0x154] sm:$0xf]
  %v104 = vld [vmem:[%s1 + $0x158] sm:$0xf]
  %v105 = vld [vmem:[%s1 + $0x15c] sm:$0xf]
  %v106 = vld [vmem:[%s1 + $0x160] sm:$0xf]
  %v107 = vld [vmem:[%s1 + $0x164] sm:$0xf]
  %v108 = vld [vmem:[%s1 + $0x168] sm:$0xf]
  %v109 = vld [vmem:[%s1 + $0x16c] sm:$0xf]
  %v110 = vld [vmem:[%s1 + $0x170] sm:$0xf]
  %v111 = vld [vmem:[%s1 + $0x174] sm:$0xf]
  %v112 = vld [vmem:[%s1 + $0x178] sm:$0xf]
  %v113 = vld [vmem:[%s1 + $0x17c] sm:$0xf]
  %v114 = vld [vmem:[%s1 + $0x180] sm:$0xf]
  %v115 = vld [vmem:[%s1 + $0x184] sm:$0xf]
  %v116 = vld [vmem:[%s1 + $0x188] sm:$0xf]
  %v117 = vld [vmem:[%s1 + $0x18c] sm:$0xf]
  %v118 = vld [vmem:[%s1 + $0x190] sm:$0xf]
  %v119 = vld [vmem:[%s1 + $0x194] sm:$0xf]
  %v120 = vld [vmem:[%s1 + $0x198] sm:$0xf]
  %v121 = vld [vmem:[%s1 + $0x19c] sm:$0xf]
  %v122 = vld [vmem:[%s1 + $0x1a0] sm:$0xf]
  %v123 = vld [vmem:[%s1 + $0x1a4] sm:$0xf]
  %v124 = vld [vmem:[%s1 + $0x1a8] sm:$0xf]
  %v125 = vld [vmem:[%s1 + $0x1ac] sm:$0xf]
  %v126 = vld [vmem:[%s1 + $0x1b0] sm:$0xf]
  %v127 = vld [vmem:[%s1 + $0x1b4] sm:$0xf]
  %v128 = vld [vmem:[%s1 + $0x1b8] sm:$0xf]
  %v129 = vld [vmem:[%s1 + $0x1bc] sm:$0xf]
  %v130 = vld [vmem:[%s1 + $0x1c0] sm:$0xf]
  %v131 = vld [vmem:[%s1 + $0x1c4] sm:$0xf]
  %v132 = vld [vmem:[%s1 + $0x1c8] sm:$0xf]
  %v133 = vld [vmem:[%s1 + $0x1cc] sm:$0xf]
  %v134 = vld [vmem:[%s1 + $0x1d0] sm:$0xf]
  %v135 = vld [vmem:[%s1 + $0x1d4] sm:$0xf]
  %v136 = vld [vmem:[%s1 + $0x1d8] sm:$0xf]
  %v137 = vld [vmem:[%s1 + $0x1dc] sm:$0xf]
  %v138 = vld [vmem:[%s1 + $0x1e0] sm:$0xf]
  %v139 = vld [vmem:[%s1 + $0x1e4] sm:$0xf]
  %v140 = vld [vmem:[%s1 + $0x1e8] sm:$0xf]
  %v141 = vld [vmem:[%s1 + $0x1ec] sm:$0xf]
  %v142 = vld [vmem:[%s1 + $0x1f0] sm:$0xf]
  %v143 = vld [vmem:[%s1 + $0x1f4] sm:$0xf]
  %v144 = vld [vmem:[%s1 + $0x1f8] sm:$0xf]
  %v145 = vld [vmem:[%s1 + $0x1fc] sm:$0xf]
  %v146 = vld [vmem:[%s2] sm:$0x1]
  %v148 = vperm.slane %v146, 0
  %v154 = vunpack.c.l.b16 %v14
  %v155 = vunpack.c.h.b16 %v14
  %v156 = vunpack.c.l.b16 %v15
  %v157 = vunpack.c.h.b16 %v15
  %v158 = vunpack.c.l.b16 %v16
  %v159 = vunpack.c.h.b16 %v16
  %v160 = vunpack.c.l.b16 %v17
  %v161 = vunpack.c.h.b16 %v17
  %v162 = vpack.c.b16 %v154, %v154
  %v163 = vpack.c.b16 %v155, %v155
  %v164 = vpack.c.b16 %v156, %v156
  %v165 = vpack.c.b16 %v157, %v157
  %v166 = vpack.c.b16 %v158, %v158
  %v167 = vpack.c.b16 %v159, %v159
  %v168 = vpack.c.b16 %v160, %v160
  %v169 = vpack.c.b16 %v161, %v161
  %v306 = vunpack.c.l.b16 %v18
  %v307 = vunpack.c.l.b16 %v19
  %v308 = vunpack.c.l.b16 %v20
  %v309 = vunpack.c.l.b16 %v21
  %v310 = vunpack.c.l.b16 %v22
  %v311 = vunpack.c.l.b16 %v23
  %v312 = vunpack.c.l.b16 %v24
  %v313 = vunpack.c.l.b16 %v25
  %v314 = vunpack.c.l.b16 %v26
  %v315 = vunpack.c.l.b16 %v27
  %v316 = vunpack.c.l.b16 %v28
  %v317 = vunpack.c.l.b16 %v29
  %v318 = vunpack.c.l.b16 %v30
  %v319 = vunpack.c.l.b16 %v31
  %v320 = vunpack.c.l.b16 %v32
  %v321 = vunpack.c.l.b16 %v33
  %v322 = vunpack.c.l.b16 %v34
  %v323 = vunpack.c.l.b16 %v35
  %v324 = vunpack.c.l.b16 %v36
  %v325 = vunpack.c.l.b16 %v37
  %v326 = vunpack.c.l.b16 %v38
  %v327 = vunpack.c.l.b16 %v39
  %v328 = vunpack.c.l.b16 %v40
  %v329 = vunpack.c.l.b16 %v41
  %v330 = vunpack.c.l.b16 %v42
  %v331 = vunpack.c.l.b16 %v43
  %v332 = vunpack.c.l.b16 %v44
  %v333 = vunpack.c.l.b16 %v45
  %v334 = vunpack.c.l.b16 %v46
  %v335 = vunpack.c.l.b16 %v47
  %v336 = vunpack.c.l.b16 %v48
  %v337 = vunpack.c.l.b16 %v49
  %v338 = vunpack.c.l.b16 %v50
  %v339 = vunpack.c.l.b16 %v51
  %v340 = vunpack.c.l.b16 %v52
  %v341 = vunpack.c.l.b16 %v53
  %v342 = vunpack.c.l.b16 %v54
  %v343 = vunpack.c.l.b16 %v55
  %v344 = vunpack.c.l.b16 %v56
  %v345 = vunpack.c.l.b16 %v57
  %v346 = vunpack.c.l.b16 %v58
  %v347 = vunpack.c.l.b16 %v59
  %v348 = vunpack.c.l.b16 %v60
  %v349 = vunpack.c.l.b16 %v61
  %v350 = vunpack.c.l.b16 %v62
  %v351 = vunpack.c.l.b16 %v63
  %v352 = vunpack.c.l.b16 %v64
  %v353 = vunpack.c.l.b16 %v65
  %v354 = vunpack.c.l.b16 %v66
  %v355 = vunpack.c.l.b16 %v67
  %v356 = vunpack.c.l.b16 %v68
  %v357 = vunpack.c.l.b16 %v69
  %v358 = vunpack.c.l.b16 %v70
  %v359 = vunpack.c.l.b16 %v71
  %v360 = vunpack.c.l.b16 %v72
  %v361 = vunpack.c.l.b16 %v73
  %v362 = vunpack.c.l.b16 %v74
  %v363 = vunpack.c.l.b16 %v75
  %v364 = vunpack.c.l.b16 %v76
  %v365 = vunpack.c.l.b16 %v77
  %v366 = vunpack.c.l.b16 %v78
  %v367 = vunpack.c.l.b16 %v79
  %v368 = vunpack.c.l.b16 %v80
  %v369 = vunpack.c.l.b16 %v81
  %v370 = vunpack.c.l.b16 %v82
  %v371 = vunpack.c.l.b16 %v83
  %v372 = vunpack.c.l.b16 %v84
  %v373 = vunpack.c.l.b16 %v85
  %v374 = vunpack.c.l.b16 %v86
  %v375 = vunpack.c.l.b16 %v87
  %v376 = vunpack.c.l.b16 %v88
  %v377 = vunpack.c.l.b16 %v89
  %v378 = vunpack.c.l.b16 %v90
  %v379 = vunpack.c.l.b16 %v91
  %v380 = vunpack.c.l.b16 %v92
  %v381 = vunpack.c.l.b16 %v93
  %v382 = vunpack.c.l.b16 %v94
  %v383 = vunpack.c.l.b16 %v95
  %v384 = vunpack.c.l.b16 %v96
  %v385 = vunpack.c.l.b16 %v97
  %v386 = vunpack.c.l.b16 %v98
  %v387 = vunpack.c.l.b16 %v99
  %v388 = vunpack.c.l.b16 %v100
  %v389 = vunpack.c.l.b16 %v101
  %v390 = vunpack.c.l.b16 %v102
  %v391 = vunpack.c.l.b16 %v103
  %v392 = vunpack.c.l.b16 %v104
  %v393 = vunpack.c.l.b16 %v105
  %v394 = vunpack.c.l.b16 %v106
  %v395 = vunpack.c.l.b16 %v107
  %v396 = vunpack.c.l.b16 %v108
  %v397 = vunpack.c.l.b16 %v109
  %v398 = vunpack.c.l.b16 %v110
  %v399 = vunpack.c.l.b16 %v111
  %v400 = vunpack.c.l.b16 %v112
  %v401 = vunpack.c.l.b16 %v113
  %v402 = vunpack.c.l.b16 %v114
  %v403 = vunpack.c.l.b16 %v115
  %v404 = vunpack.c.l.b16 %v116
  %v405 = vunpack.c.l.b16 %v117
  %v406 = vunpack.c.l.b16 %v118
  %v407 = vunpack.c.l.b16 %v119
  %v408 = vunpack.c.l.b16 %v120
  %v409 = vunpack.c.l.b16 %v121
  %v410 = vunpack.c.l.b16 %v122
  %v411 = vunpack.c.l.b16 %v123
  %v412 = vunpack.c.l.b16 %v124
  %v413 = vunpack.c.l.b16 %v125
  %v414 = vunpack.c.l.b16 %v126
  %v415 = vunpack.c.l.b16 %v127
  %v416 = vunpack.c.l.b16 %v128
  %v417 = vunpack.c.l.b16 %v129
  %v418 = vunpack.c.l.b16 %v130
  %v419 = vunpack.c.l.b16 %v131
  %v420 = vunpack.c.l.b16 %v132
  %v421 = vunpack.c.l.b16 %v133
  %v422 = vunpack.c.l.b16 %v134
  %v423 = vunpack.c.l.b16 %v135
  %v424 = vunpack.c.l.b16 %v136
  %v425 = vunpack.c.l.b16 %v137
  %v426 = vunpack.c.l.b16 %v138
  %v427 = vunpack.c.l.b16 %v139
  %v428 = vunpack.c.l.b16 %v140
  %v429 = vunpack.c.l.b16 %v141
  %v430 = vunpack.c.l.b16 %v142
  %v431 = vunpack.c.l.b16 %v143
  %v432 = vunpack.c.l.b16 %v144
  %v433 = vunpack.c.l.b16 %v145
  %v434 = vpack.c.b16 %v307, %v306
  %v435 = vpack.c.b16 %v309, %v308
  %v436 = vpack.c.b16 %v311, %v310
  %v437 = vpack.c.b16 %v313, %v312
  %v438 = vpack.c.b16 %v315, %v314
  %v439 = vpack.c.b16 %v317, %v316
  %v440 = vpack.c.b16 %v319, %v318
  %v441 = vpack.c.b16 %v321, %v320
  %v442 = vpack.c.b16 %v323, %v322
  %v443 = vpack.c.b16 %v325, %v324
  %v444 = vpack.c.b16 %v327, %v326
  %v445 = vpack.c.b16 %v329, %v328
  %v446 = vpack.c.b16 %v331, %v330
  %v447 = vpack.c.b16 %v333, %v332
  %v448 = vpack.c.b16 %v335, %v334
  %v449 = vpack.c.b16 %v337, %v336
  %v450 = vpack.c.b16 %v339, %v338
  %v451 = vpack.c.b16 %v341, %v340
  %v452 = vpack.c.b16 %v343, %v342
  %v453 = vpack.c.b16 %v345, %v344
  %v454 = vpack.c.b16 %v347, %v346
  %v455 = vpack.c.b16 %v349, %v348
  %v456 = vpack.c.b16 %v351, %v350
  %v457 = vpack.c.b16 %v353, %v352
  %v458 = vpack.c.b16 %v355, %v354
  %v459 = vpack.c.b16 %v357, %v356
  %v460 = vpack.c.b16 %v359, %v358
  %v461 = vpack.c.b16 %v361, %v360
  %v462 = vpack.c.b16 %v363, %v362
  %v463 = vpack.c.b16 %v365, %v364
  %v464 = vpack.c.b16 %v367, %v366
  %v465 = vpack.c.b16 %v369, %v368
  %v466 = vpack.c.b16 %v371, %v370
  %v467 = vpack.c.b16 %v373, %v372
  %v468 = vpack.c.b16 %v375, %v374
  %v469 = vpack.c.b16 %v377, %v376
  %v470 = vpack.c.b16 %v379, %v378
  %v471 = vpack.c.b16 %v381, %v380
  %v472 = vpack.c.b16 %v383, %v382
  %v473 = vpack.c.b16 %v385, %v384
  %v474 = vpack.c.b16 %v387, %v386
  %v475 = vpack.c.b16 %v389, %v388
  %v476 = vpack.c.b16 %v391, %v390
  %v477 = vpack.c.b16 %v393, %v392
  %v478 = vpack.c.b16 %v395, %v394
  %v479 = vpack.c.b16 %v397, %v396
  %v480 = vpack.c.b16 %v399, %v398
  %v481 = vpack.c.b16 %v401, %v400
  %v482 = vpack.c.b16 %v403, %v402
  %v483 = vpack.c.b16 %v405, %v404
  %v484 = vpack.c.b16 %v407, %v406
  %v485 = vpack.c.b16 %v409, %v408
  %v486 = vpack.c.b16 %v411, %v410
  %v487 = vpack.c.b16 %v413, %v412
  %v488 = vpack.c.b16 %v415, %v414
  %v489 = vpack.c.b16 %v417, %v416
  %v490 = vpack.c.b16 %v419, %v418
  %v491 = vpack.c.b16 %v421, %v420
  %v492 = vpack.c.b16 %v423, %v422
  %v493 = vpack.c.b16 %v425, %v424
  %v494 = vpack.c.b16 %v427, %v426
  %v495 = vpack.c.b16 %v429, %v428
  %v496 = vpack.c.b16 %v431, %v430
  %v497 = vpack.c.b16 %v433, %v432
  %562 = vmatpush.bf16.msra.mxu0 %v441
  %563 = vmatpush.bf16.msra.mxu0 %v440
  %564 = vmatpush.bf16.msra.mxu0 %v439
  %565 = vmatpush.bf16.msra.mxu0 %v438
  %566 = vmatpush.bf16.msra.mxu0 %v437
  %567 = vmatpush.bf16.msra.mxu0 %v436
  %568 = vmatpush.bf16.msra.mxu0 %v435
  %569 = vmatpush.bf16.msra.mxu0 %v434
  %570 = vmatmul.bf16.gmra.mxu0 %v162
  %v571 = vpop.f32.mrf.mxu0
  %v572 = vadd.f32 %v148, %v571
  %v573 = vpop.f32.mrf.mxu0
  %574 = vdwg.mxu0
  %575 = vmatpush.bf16.msra.mxu0 %v449
  %576 = vmatpush.bf16.msra.mxu0 %v448
  %577 = vmatpush.bf16.msra.mxu0 %v447
  %578 = vmatpush.bf16.msra.mxu0 %v446
  %579 = vmatpush.bf16.msra.mxu0 %v445
  %580 = vmatpush.bf16.msra.mxu0 %v444
  %581 = vmatpush.bf16.msra.mxu0 %v443
  %582 = vmatpush.bf16.msra.mxu0 %v442
  %583 = vmatmul.bf16.gmra.mxu0 %v163
  %v584 = vpop.f32.mrf.mxu0
  %v585 = vadd.f32 %v572, %v584
  %v586 = vpop.f32.mrf.mxu0
  %587 = vdwg.mxu0
  %588 = vmatpush.bf16.msra.mxu0 %v457
  %589 = vmatpush.bf16.msra.mxu0 %v456
  %590 = vmatpush.bf16.msra.mxu0 %v455
  %591 = vmatpush.bf16.msra.mxu0 %v454
  %592 = vmatpush.bf16.msra.mxu0 %v453
  %593 = vmatpush.bf16.msra.mxu0 %v452
  %594 = vmatpush.bf16.msra.mxu0 %v451
  %595 = vmatpush.bf16.msra.mxu0 %v450
  %596 = vmatmul.bf16.gmra.mxu0 %v164
  %v597 = vpop.f32.mrf.mxu0
  %v598 = vadd.f32 %v585, %v597
  %v599 = vpop.f32.mrf.mxu0
  %600 = vdwg.mxu0
  %601 = vmatpush.bf16.msra.mxu0 %v465
  %602 = vmatpush.bf16.msra.mxu0 %v464
  %603 = vmatpush.bf16.msra.mxu0 %v463
  %604 = vmatpush.bf16.msra.mxu0 %v462
  %605 = vmatpush.bf16.msra.mxu0 %v461
  %606 = vmatpush.bf16.msra.mxu0 %v460
  %607 = vmatpush.bf16.msra.mxu0 %v459
  %608 = vmatpush.bf16.msra.mxu0 %v458
  %609 = vmatmul.bf16.gmra.mxu0 %v165
  %v610 = vpop.f32.mrf.mxu0
  %v611 = vadd.f32 %v598, %v610
  %v612 = vpop.f32.mrf.mxu0
  %613 = vdwg.mxu0
  %614 = vmatpush.bf16.msra.mxu0 %v473
  %615 = vmatpush.bf16.msra.mxu0 %v472
  %616 = vmatpush.bf16.msra.mxu0 %v471
  %617 = vmatpush.bf16.msra.mxu0 %v470
  %618 = vmatpush.bf16.msra.mxu0 %v469
  %619 = vmatpush.bf16.msra.mxu0 %v468
  %620 = vmatpush.bf16.msra.mxu0 %v467
  %621 = vmatpush.bf16.msra.mxu0 %v466
  %622 = vmatmul.bf16.gmra.mxu0 %v166
  %v623 = vpop.f32.mrf.mxu0
  %v624 = vadd.f32 %v611, %v623
  %v625 = vpop.f32.mrf.mxu0
  %626 = vdwg.mxu0
  %627 = vmatpush.bf16.msra.mxu0 %v481
  %628 = vmatpush.bf16.msra.mxu0 %v480
  %629 = vmatpush.bf16.msra.mxu0 %v479
  %630 = vmatpush.bf16.msra.mxu0 %v478
  %631 = vmatpush.bf16.msra.mxu0 %v477
  %632 = vmatpush.bf16.msra.mxu0 %v476
  %633 = vmatpush.bf16.msra.mxu0 %v475
  %634 = vmatpush.bf16.msra.mxu0 %v474
  %635 = vmatmul.bf16.gmra.mxu0 %v167
  %v636 = vpop.f32.mrf.mxu0
  %v637 = vadd.f32 %v624, %v636
  %v638 = vpop.f32.mrf.mxu0
  %639 = vdwg.mxu0
  %640 = vmatpush.bf16.msra.mxu0 %v489
  %641 = vmatpush.bf16.msra.mxu0 %v488
  %642 = vmatpush.bf16.msra.mxu0 %v487
  %643 = vmatpush.bf16.msra.mxu0 %v486
  %644 = vmatpush.bf16.msra.mxu0 %v485
  %645 = vmatpush.bf16.msra.mxu0 %v484
  %646 = vmatpush.bf16.msra.mxu0 %v483
  %647 = vmatpush.bf16.msra.mxu0 %v482
  %648 = vmatmul.bf16.gmra.mxu0 %v168
  %v649 = vpop.f32.mrf.mxu0
  %v650 = vadd.f32 %v637, %v649
  %v651 = vpop.f32.mrf.mxu0
  %652 = vdwg.mxu0
  %653 = vmatpush.bf16.msra.mxu0 %v497
  %654 = vmatpush.bf16.msra.mxu0 %v496
  %655 = vmatpush.bf16.msra.mxu0 %v495
  %656 = vmatpush.bf16.msra.mxu0 %v494
  %657 = vmatpush.bf16.msra.mxu0 %v493
  %658 = vmatpush.bf16.msra.mxu0 %v492
  %659 = vmatpush.bf16.msra.mxu0 %v491
  %660 = vmatpush.bf16.msra.mxu0 %v490
  %661 = vmatmul.bf16.gmra.mxu0 %v169
  %v662 = vpop.f32.mrf.mxu0
  %v663 = vadd.f32 %v650, %v662
  %v664 = vpop.f32.mrf.mxu0
  %665 = vdwg.mxu0
  %666 = vst [vmem:[%s3] sm:$0x3f] %v663
  // Predicated region
  $region14: #{naver_net_forward.1} parent=0 // pred_check
    _
  $region15: #{naver_net_forward.1} parent=0 // pred_check_branch
    %668 = sbr.rel (0) target = $region17
  $region16: #{naver_net_forward.1} parent=0 // pred_region
    _
  $region17: #{naver_net_forward.1} parent=0 // pred_fallthru
    _
  // Predicated region
  $region18: #{naver_net_forward.1} parent=0 // pred_check
    _
  $region19: #{naver_net_forward.1} parent=0 // pred_check_branch
    %670 = sbr.rel (0) target = $region21
  $region20: #{naver_net_forward.1} parent=0 // pred_region
    _
  $region21: #{naver_net_forward.1} parent=0 // pred_fallthru
    _

</llo_original>
